<compile_context>
chip_gen: v7x
topology: tpu7x:2x2x1
jax: 0.10.0
libtpu: 0.0.40
codegen_flags: <defaults>
</compile_context>

<pallas_src>
import functools

import jax
import jax.numpy as jnp
from jax.experimental import pallas as pl
from jax.experimental.pallas import tpu as pltpu

D_IN, H, D_OUT = 1, 1024, 2


def _round_up(n, m):
    return ((n + m - 1) // m) * m


def shallow_linear_kernel(x_ref, bits_ref, w1_ref, b1_ref, w2t_ref, b2_ref,
                          out_ref, *, p):
    x = x_ref[...]                                    # (TN, 1) f32
    # linear1: D_in == 1  ->  outer product == broadcast multiply-add on the VPU
    h = x * w1_ref[...] + b1_ref[...]                 # (TN, H) f32

    # train-mode inverted dropout; integer-domain keep test (P(keep) = 1 - p)
    if p > 0.0:
        thresh = jnp.uint32(min(int(round(p * (1 << 32))), (1 << 32) - 1))
        keep = bits_ref[...] >= thresh                # (TN, H) bool
        h = jnp.where(keep, h * jnp.float32(1.0 / (1.0 - p)), 0.0)

    # relu
    h = jnp.maximum(h, 0.0)

    # linear2 on the MXU, emitted transposed so the output block is lane-dense:
    # (D_OUT, H) . (TN, H) contracting H  ->  (D_OUT, TN)
    out = jax.lax.dot_general(
        w2t_ref[...], h,
        dimension_numbers=(((1,), (1,)), ((), ())),
        preferred_element_type=jnp.float32)
    out_ref[...] = out + b2_ref[...]                  # b2 is (D_OUT, 1), broadcasts over TN


def shallow_linear(x, w1, b1, w2t, b2, dropout_key, *, p):
    """x: (N, 1) f32; w1: (D_IN, H); b1: (1, H); w2t: (D_OUT, H) (= PyTorch
    linear2.weight layout); b2: (D_OUT, 1).  Returns (out0, out1), each (N, 1)."""
    assert 0.0 <= p < 1.0, "dropout p must be in [0, 1)"
    N = x.shape[0]

    # Batch tile: multiple of 8 (sublane), capped at 1024 (~4 MiB of h per step,
    # well under the 16/32 MiB scoped-VMEM defaults of v5e / v6e / v7x).
    TN = 1024 if N >= 1024 else _round_up(max(N, 1), 8)
    N_pad = _round_up(N, TN)
    if N_pad != N:
        x = jnp.pad(x, ((0, N_pad - N), (0, 0)))

    # Dropout randomness: raw uint32 bits, one per activation element.
    bits = jax.random.bits(dropout_key, (N_pad, H), dtype=jnp.uint32)

    grid = (N_pad // TN,)
    flops = 2 * N_pad * H * D_OUT + 4 * N_pad * H
    bytes_accessed = 4 * (N_pad * D_IN + N_pad * H            # x + dropout bits
                          + D_IN * H + H + D_OUT * H + D_OUT  # weights/biases
                          + D_OUT * N_pad)                    # output

    out_t = pl.pallas_call(
        functools.partial(shallow_linear_kernel, p=p),
        out_shape=jax.ShapeDtypeStruct((D_OUT, N_pad), jnp.float32),
        grid=grid,
        in_specs=[
            pl.BlockSpec((TN, D_IN), lambda i: (i, 0)),   # x tile
            pl.BlockSpec((TN, H),    lambda i: (i, 0)),   # dropout bits tile
            pl.BlockSpec((D_IN, H),  lambda i: (0, 0)),   # w1 (resident)
            pl.BlockSpec((1, H),     lambda i: (0, 0)),   # b1 (resident)
            pl.BlockSpec((D_OUT, H), lambda i: (0, 0)),   # w2^T (resident)
            pl.BlockSpec((D_OUT, 1), lambda i: (0, 0)),   # b2 (resident)
        ],
        out_specs=pl.BlockSpec((D_OUT, TN), lambda i: (0, i)),  # lane-dense output
        compiler_params=pltpu.CompilerParams(
            dimension_semantics=("parallel",)),
        cost_estimate=pl.CostEstimate(
            flops=flops, transcendentals=0, bytes_accessed=bytes_accessed),
    )(x, bits, w1, b1, w2t, b2)

    # forward returns (out[:, 0].unsqueeze(1), out[:, 1].unsqueeze(1))
    out0 = out_t[0, :N].reshape(N, 1)
    out1 = out_t[1, :N].reshape(N, 1)
    return out0, out1


if __name__ == "__main__":
    key = jax.random.PRNGKey(0)
    k_x, k_w1, k_b1, k_w2, k_b2, k_drop = jax.random.split(key, 6)

    N = 8
    p = 0.25

    # input: (batch, D_in=1)
    x = jax.random.normal(k_x, (N, D_IN), dtype=jnp.float32)

    # deterministic parameter init mimicking nn.Linear default U(-1/sqrt(fan_in), 1/sqrt(fan_in))
    k1 = 1.0 / (D_IN ** 0.5)
    k2 = 1.0 / (H ** 0.5)
    w1 = jax.random.uniform(k_w1, (D_IN, H), jnp.float32, -k1, k1)    # linear1.weight.T
    b1 = jax.random.uniform(k_b1, (1, H), jnp.float32, -k1, k1)       # linear1.bias
    w2t = jax.random.uniform(k_w2, (D_OUT, H), jnp.float32, -k2, k2)  # linear2.weight (out, in)
    b2 = jax.random.uniform(k_b2, (D_OUT, 1), jnp.float32, -k2, k2)   # linear2.bias

    out0, out1 = shallow_linear(x, w1, b1, w2t, b2, k_drop, p=p)
    jax.block_until_ready((out0, out1))
    assert out0.shape == (N, 1) and out1.shape == (N, 1)
    assert bool(jnp.all(jnp.isfinite(out0))) and bool(jnp.all(jnp.isfinite(out1)))
    print("KERNEL_OK")
</pallas_src>

<mosaic_0001>
module attributes {stable_mosaic.version = 11 : i64} {
  func.func @shallow_linear_kernel(%arg0: i32, %arg1: memref<8x1xf32, #tpu.memory_space<vmem>>, %arg2: memref<8x1024xi32, #tpu.memory_space<vmem>>, %arg3: memref<1x1024xf32, #tpu.memory_space<vmem>>, %arg4: memref<1x1024xf32, #tpu.memory_space<vmem>>, %arg5: memref<2x1024xf32, #tpu.memory_space<vmem>>, %arg6: memref<2x1xf32, #tpu.memory_space<vmem>>, %arg7: memref<2x8xf32, #tpu.memory_space<vmem>>) attributes {dimension_semantics = [#tpu.dimension_semantics<parallel>], iteration_bounds = array<i64: 1>, scalar_prefetch = 0 : i64, scratch_operands = 0 : i64, tpu.core_type = #tpu.core_type<tc>, window_params = [{transform_indices = @transform_0, window_bounds = array<i64: 8, 1>}, {transform_indices = @transform_1, window_bounds = array<i64: 8, 1024>}, {pipeline_mode = #tpu.pipeline_mode<synchronous>, transform_indices = @transform_2, window_bounds = array<i64: 1, 1024>}, {pipeline_mode = #tpu.pipeline_mode<synchronous>, transform_indices = @transform_3, window_bounds = array<i64: 1, 1024>}, {pipeline_mode = #tpu.pipeline_mode<synchronous>, transform_indices = @transform_4, window_bounds = array<i64: 2, 1024>}, {pipeline_mode = #tpu.pipeline_mode<synchronous>, transform_indices = @transform_5, window_bounds = array<i64: 2, 1>}, {transform_indices = @transform_6, window_bounds = array<i64: 2, 8>}]} {
    %c0 = arith.constant 0 : index
    %c0_0 = arith.constant 0 : index
    %0 = vector.load %arg1[%c0, %c0_0] : memref<8x1xf32, #tpu.memory_space<vmem>>, vector<8x1xf32>
    %c0_1 = arith.constant 0 : index
    %c0_2 = arith.constant 0 : index
    %1 = vector.load %arg3[%c0_1, %c0_2] : memref<1x1024xf32, #tpu.memory_space<vmem>>, vector<1x1024xf32>
    %2 = vector.broadcast %0 : vector<8x1xf32> to vector<8x1024xf32>
    %3 = vector.broadcast %1 : vector<1x1024xf32> to vector<8x1024xf32>
    %4 = arith.mulf %2, %3 : vector<8x1024xf32>
    %c0_3 = arith.constant 0 : index
    %c0_4 = arith.constant 0 : index
    %5 = vector.load %arg4[%c0_3, %c0_4] : memref<1x1024xf32, #tpu.memory_space<vmem>>, vector<1x1024xf32>
    %6 = vector.broadcast %5 : vector<1x1024xf32> to vector<8x1024xf32>
    %7 = arith.addf %4, %6 : vector<8x1024xf32>
    %c0_5 = arith.constant 0 : index
    %c0_6 = arith.constant 0 : index
    %8 = vector.load %arg2[%c0_5, %c0_6] : memref<8x1024xi32, #tpu.memory_space<vmem>>, vector<8x1024xi32>
    %c1073741824_i32 = arith.constant 1073741824 : i32
    %9 = vector.broadcast %c1073741824_i32 : i32 to vector<8x1024xi32>
    %10 = arith.cmpi uge, %8, %9 : vector<8x1024xi32>
    %cst = arith.constant 1.33333337 : f32
    %11 = vector.broadcast %cst : f32 to vector<8x1024xf32>
    %12 = arith.mulf %7, %11 : vector<8x1024xf32>
    %cst_7 = arith.constant 0.000000e+00 : f32
    %13 = vector.broadcast %cst_7 : f32 to vector<8x1024xf32>
    %14 = arith.select %10, %12, %13 : vector<8x1024xi1>, vector<8x1024xf32>
    %cst_8 = arith.constant 0.000000e+00 : f32
    %15 = vector.broadcast %cst_8 : f32 to vector<8x1024xf32>
    %16 = arith.maximumf %14, %15 : vector<8x1024xf32>
    %c0_9 = arith.constant 0 : index
    %c0_10 = arith.constant 0 : index
    %17 = vector.load %arg5[%c0_9, %c0_10] : memref<2x1024xf32, #tpu.memory_space<vmem>>, vector<2x1024xf32>
    %cst_11 = arith.constant dense<0.000000e+00> : vector<2x8xf32>
    %18 = tpu.matmul %17, %16, %cst_11 {dimension_numbers = #tpu.dot_dimension_numbers<[1], [1], [0], [0], [0, 0, 1, 0], [], []>} : vector<2x1024xf32>, vector<8x1024xf32>, vector<2x8xf32> -> vector<2x8xf32>
    %c0_12 = arith.constant 0 : index
    %c0_13 = arith.constant 0 : index
    %19 = vector.load %arg6[%c0_12, %c0_13] : memref<2x1xf32, #tpu.memory_space<vmem>>, vector<2x1xf32>
    %20 = vector.broadcast %19 : vector<2x1xf32> to vector<2x8xf32>
    %21 = arith.addf %18, %20 : vector<2x8xf32>
    %c0_14 = arith.constant 0 : index
    %c0_15 = arith.constant 0 : index
    %22 = vector.load %arg7[%c0_14, %c0_15] : memref<2x8xf32, #tpu.memory_space<vmem>>, vector<2x8xf32>
    tpu.vector_store %arg7[%c0_14, %c0_15], %21 {strides = array<i32>} : memref<2x8xf32, #tpu.memory_space<vmem>>, vector<2x8xf32>,
    return
  }
  func.func @transform_0(%arg0: i32) -> (i32, i32) {
    %c0_i32 = arith.constant 0 : i32
    %c0_i32_0 = arith.constant 0 : i32
    return %arg0, %c0_i32 : i32, i32
  }
  func.func @transform_1(%arg0: i32) -> (i32, i32) {
    %c0_i32 = arith.constant 0 : i32
    %c0_i32_0 = arith.constant 0 : i32
    return %arg0, %c0_i32 : i32, i32
  }
  func.func @transform_2(%arg0: i32) -> (i32, i32) {
    %c0_i32 = arith.constant 0 : i32
    %c0_i32_0 = arith.constant 0 : i32
    %c0_i32_1 = arith.constant 0 : i32
    return %c0_i32, %c0_i32_0 : i32, i32
  }
  func.func @transform_3(%arg0: i32) -> (i32, i32) {
    %c0_i32 = arith.constant 0 : i32
    %c0_i32_0 = arith.constant 0 : i32
    %c0_i32_1 = arith.constant 0 : i32
    return %c0_i32, %c0_i32_0 : i32, i32
  }
  func.func @transform_4(%arg0: i32) -> (i32, i32) {
    %c0_i32 = arith.constant 0 : i32
    %c0_i32_0 = arith.constant 0 : i32
    %c0_i32_1 = arith.constant 0 : i32
    return %c0_i32, %c0_i32_0 : i32, i32
  }
  func.func @transform_5(%arg0: i32) -> (i32, i32) {
    %c0_i32 = arith.constant 0 : i32
    %c0_i32_0 = arith.constant 0 : i32
    %c0_i32_1 = arith.constant 0 : i32
    return %c0_i32, %c0_i32_0 : i32, i32
  }
  func.func @transform_6(%arg0: i32) -> (i32, i32) {
    %c0_i32 = arith.constant 0 : i32
    %c0_i32_0 = arith.constant 0 : i32
    return %c0_i32, %arg0 : i32, i32
  }
}

</mosaic_0001>

<llo_original>
// kernel: tpu_custom_call.1
$region0: #{tpu_custom_call.1}
  #allocation0 [shape = 'u32[]', space=smem, size = 0x4, offset = 0x4, fixed_abs, tag = 'smem constant byte address 0x4 - core index']
  #allocation1 [shape = 'u32[144,128]{1,0:T(1,128)}', space=vmem, size = 0x12000, scoped, tag = 'internal scratch']
  %s0 = inlined_call_operand.vmem [shape: f32[8,1], index: 0, kind: input, shape index: {}]
  %s1 = inlined_call_operand.hbm [shape: u32[8,1024], index: 1, kind: input, shape index: {}]
  %s2 = inlined_call_operand.vmem [shape: f32[1,1024], index: 2, kind: input, shape index: {}]
  %s3 = inlined_call_operand.hbm [shape: f32[1,1024], index: 3, kind: input, shape index: {}]
  %s4 = inlined_call_operand.vmem [shape: f32[2,1024], index: 4, kind: input, shape index: {}]
  %s5 = inlined_call_operand.vmem [shape: f32[2,1], index: 5, kind: input, shape index: {}]
  %s6 = inlined_call_operand.hbm [shape: f32[2,8], index: 6, kind: output, shape index: {}]
  %s7 = sld [smem:[#allocation0]]
  $region42: #{tpu_custom_call.1} parent=0
    _
  %s9 = ssub.s32 1, %s7
  %s10 = scalar_select 0, %s9, %s7
  $region1: #{tpu_custom_call.1} parent=0
    #allocation2 [shape = 'u8[32768]{0}', space=vmem, size = 0x8000, scoped, tag = 'input window, operand 1, single buffered']
    #allocation3 [shape = 's32[1]{0}', space=sflag, size = 0x4, scoped, tag = 'scoped memory for tpu_custom_call.1']
    #allocation4 [shape = 's32[1]{0}', space=sflag, size = 0x4, scoped, tag = 'scoped memory for tpu_custom_call.1']
    #allocation5 [shape = 'u8[4096]{0}', space=vmem, size = 0x1000, scoped, tag = 'input window, operand 3, single buffered']
    #allocation6 [shape = 's32[1]{0}', space=sflag, size = 0x4, scoped, tag = 'scoped memory for tpu_custom_call.1']
    #allocation7 [shape = 'u8[1024]{0}', space=vmem, size = 0x400, scoped, tag = 'output window, operand 0, single buffered']
    %11 = vsyncpa [#allocation3], 0
    %12 = vsyncpa [#allocation6], 0
    %13 = vsyncpa [#allocation4], 0
    // Predicated region
    $region2: #{tpu_custom_call.1} parent=1 // pred_check
      _
    $region3: #{tpu_custom_call.1} parent=1 // pred_check_branch
      %15 = sbr.rel (0) target = $region5
    $region4: #{tpu_custom_call.1} parent=1 // pred_region
      _
    $region5: #{tpu_custom_call.1} parent=1 // pred_fallthru
      _
    // Predicated region
    $region6: #{tpu_custom_call.1} parent=1 // pred_check
      _
    $region7: #{tpu_custom_call.1} parent=1 // pred_check_branch
      %17 = sbr.rel (0) target = $region9
    $region8: #{tpu_custom_call.1} parent=1 // pred_region
      %s19 = ssub.s32 1024, 1024
      %20 = vsyncadd [#allocation3], %s19
      %s22 = sshll.u32 [#allocation2], 4
      %s23 = int_to_ptr.vmem [resolvable:$true] %s22
      %25 = dma.hbm_to_vmem [thread:$0]  %s1, 1024, %s23, [#allocation3]
    $region9: #{tpu_custom_call.1} parent=1 // pred_fallthru
      _
    // Predicated region
    $region10: #{tpu_custom_call.1} parent=1 // pred_check
      _
    $region11: #{tpu_custom_call.1} parent=1 // pred_check_branch
      %27 = sbr.rel (0) target = $region13
    $region12: #{tpu_custom_call.1} parent=1 // pred_region
      _
    $region13: #{tpu_custom_call.1} parent=1 // pred_fallthru
      _
    // Predicated region
    $region14: #{tpu_custom_call.1} parent=1 // pred_check
      _
    $region15: #{tpu_custom_call.1} parent=1 // pred_check_branch
      %29 = sbr.rel (0) target = $region17
    $region16: #{tpu_custom_call.1} parent=1 // pred_region
      %s31 = ssub.s32 128, 128
      %32 = vsyncadd [#allocation6], %s31
      %s34 = sshll.u32 [#allocation5], 4
      %s35 = int_to_ptr.vmem [resolvable:$true] %s34
      %37 = dma.hbm_to_vmem [thread:$0]  %s3, 128, %s35, [#allocation6]
    $region17: #{tpu_custom_call.1} parent=1 // pred_fallthru
      _
    // Predicated region
    $region18: #{tpu_custom_call.1} parent=1 // pred_check
      _
    $region19: #{tpu_custom_call.1} parent=1 // pred_check_branch
      %39 = sbr.rel (0) target = $region21
    $region20: #{tpu_custom_call.1} parent=1 // pred_region
      _
    $region21: #{tpu_custom_call.1} parent=1 // pred_fallthru
      _
    // Predicated region
    $region22: #{tpu_custom_call.1} parent=1 // pred_check
      _
    $region23: #{tpu_custom_call.1} parent=1 // pred_check_branch
      %41 = sbr.rel (0) target = $region25
    $region24: #{tpu_custom_call.1} parent=1 // pred_region
      _
    $region25: #{tpu_custom_call.1} parent=1 // pred_fallthru
      _
    // Predicated region
    $region26: #{tpu_custom_call.1} parent=1 // pred_check
      _
    $region27: #{tpu_custom_call.1} parent=1 // pred_check_branch
      %43 = sbr.rel (0) target = $region29
    $region28: #{tpu_custom_call.1} parent=1 // pred_region
      %44 = dma.done [#allocation3], 1024
    $region29: #{tpu_custom_call.1} parent=1 // pred_fallthru
      _
    // Predicated region
    $region30: #{tpu_custom_call.1} parent=1 // pred_check
      _
    $region31: #{tpu_custom_call.1} parent=1 // pred_check_branch
      %46 = sbr.rel (0) target = $region33
    $region32: #{tpu_custom_call.1} parent=1 // pred_region
      %47 = dma.done [#allocation6], 128
    $region33: #{tpu_custom_call.1} parent=1 // pred_fallthru
      _
    %v48 = vld [vmem:[%s0] sm:$0xff]
    %v49 = vld [vmem:[%s2] sm:$0xff]
    %51 = vset.pattern.permute.xlu0 0
    %52 = vperm.xlu0 %51, %v48
    %v53 = vpop.permute.xlu0 %52
    %v56 = vlaneseq
    %v57 = vshrl.u32 %v56, 7
    %v58 = vsub.s32 0, %v57
    %v59 = vrot.slane %v49, %v58
    %v60 = vlaneseq
    %v61 = vshrl.u32 %v60, 7
    %v62 = vsub.s32 1, %v61
    %v63 = vrot.slane %v49, %v62
    %v64 = vlaneseq
    %v65 = vshrl.u32 %v64, 7
    %v66 = vsub.s32 2, %v65
    %v67 = vrot.slane %v49, %v66
    %v68 = vlaneseq
    %v69 = vshrl.u32 %v68, 7
    %v70 = vsub.s32 3, %v69
    %v71 = vrot.slane %v49, %v70
    %v72 = vlaneseq
    %v73 = vshrl.u32 %v72, 7
    %v74 = vsub.s32 4, %v73
    %v75 = vrot.slane %v49, %v74
    %v76 = vlaneseq
    %v77 = vshrl.u32 %v76, 7
    %v78 = vsub.s32 5, %v77
    %v79 = vrot.slane %v49, %v78
    %v80 = vlaneseq
    %v81 = vshrl.u32 %v80, 7
    %v82 = vsub.s32 6, %v81
    %v83 = vrot.slane %v49, %v82
    %v84 = vlaneseq
    %v85 = vshrl.u32 %v84, 7
    %v86 = vsub.s32 7, %v85
    %v87 = vrot.slane %v49, %v86
    %v96 = vmul.f32 %v53, %v59
    %v97 = vmul.f32 %v53, %v63
    %v98 = vmul.f32 %v53, %v67
    %v99 = vmul.f32 %v53, %v71
    %v100 = vmul.f32 %v53, %v75
    %v101 = vmul.f32 %v53, %v79
    %v102 = vmul.f32 %v53, %v83
    %v103 = vmul.f32 %v53, %v87
    %v104 = vld [vmem:[#allocation5] sm:$0xff]
    %v106 = vlaneseq
    %v107 = vshrl.u32 %v106, 7
    %v108 = vsub.s32 0, %v107
    %v109 = vrot.slane %v104, %v108
    %v110 = vlaneseq
    %v111 = vshrl.u32 %v110, 7
    %v112 = vsub.s32 1, %v111
    %v113 = vrot.slane %v104, %v112
    %v114 = vlaneseq
    %v115 = vshrl.u32 %v114, 7
    %v116 = vsub.s32 2, %v115
    %v117 = vrot.slane %v104, %v116
    %v118 = vlaneseq
    %v119 = vshrl.u32 %v118, 7
    %v120 = vsub.s32 3, %v119
    %v121 = vrot.slane %v104, %v120
    %v122 = vlaneseq
    %v123 = vshrl.u32 %v122, 7
    %v124 = vsub.s32 4, %v123
    %v125 = vrot.slane %v104, %v124
    %v126 = vlaneseq
    %v127 = vshrl.u32 %v126, 7
    %v128 = vsub.s32 5, %v127
    %v129 = vrot.slane %v104, %v128
    %v130 = vlaneseq
    %v131 = vshrl.u32 %v130, 7
    %v132 = vsub.s32 6, %v131
    %v133 = vrot.slane %v104, %v132
    %v134 = vlaneseq
    %v135 = vshrl.u32 %v134, 7
    %v136 = vsub.s32 7, %v135
    %v137 = vrot.slane %v104, %v136
    %v146 = vadd.f32 %v96, %v109
    %v147 = vadd.f32 %v97, %v113
    %v148 = vadd.f32 %v98, %v117
    %v149 = vadd.f32 %v99, %v121
    %v150 = vadd.f32 %v100, %v125
    %v151 = vadd.f32 %v101, %v129
    %v152 = vadd.f32 %v102, %v133
    %v153 = vadd.f32 %v103, %v137
    %v154 = vld [vmem:[#allocation2] sm:$0xff]
    %v155 = vld [vmem:[#allocation2 + $0x8] sm:$0xff]
    %v156 = vld [vmem:[#allocation2 + $0x10] sm:$0xff]
    %v157 = vld [vmem:[#allocation2 + $0x18] sm:$0xff]
    %v158 = vld [vmem:[#allocation2 + $0x20] sm:$0xff]
    %v159 = vld [vmem:[#allocation2 + $0x28] sm:$0xff]
    %v160 = vld [vmem:[#allocation2 + $0x30] sm:$0xff]
    %v161 = vld [vmem:[#allocation2 + $0x38] sm:$0xff]
    %vm162 = vcmp.ge.u32.totalorder %v154, 1073741824
    %vm163 = vcmp.ge.u32.totalorder %v155, 1073741824
    %vm164 = vcmp.ge.u32.totalorder %v156, 1073741824
    %vm165 = vcmp.ge.u32.totalorder %v157, 1073741824
    %vm166 = vcmp.ge.u32.totalorder %v158, 1073741824
    %vm167 = vcmp.ge.u32.totalorder %v159, 1073741824
    %vm168 = vcmp.ge.u32.totalorder %v160, 1073741824
    %vm169 = vcmp.ge.u32.totalorder %v161, 1073741824
    %v170 = vmul.f32 %v146, 1.3333334
    %v171 = vmul.f32 %v147, 1.3333334
    %v172 = vmul.f32 %v148, 1.3333334
    %v173 = vmul.f32 %v149, 1.3333334
    %v174 = vmul.f32 %v150, 1.3333334
    %v175 = vmul.f32 %v151, 1.3333334
    %v176 = vmul.f32 %v152, 1.3333334
    %v177 = vmul.f32 %v153, 1.3333334
    %v178 = vsel %vm162, %v170, 0.0
    %v179 = vsel %vm163, %v171, 0.0
    %v180 = vsel %vm164, %v172, 0.0
    %v181 = vsel %vm165, %v173, 0.0
    %v182 = vsel %vm166, %v174, 0.0
    %v183 = vsel %vm167, %v175, 0.0
    %v184 = vsel %vm168, %v176, 0.0
    %v185 = vsel %vm169, %v177, 0.0
    %v186 = vmax.f32 %v178, 0.0
    %v187 = vmax.f32 %v179, 0.0
    %v188 = vmax.f32 %v180, 0.0
    %v189 = vmax.f32 %v181, 0.0
    %v190 = vmax.f32 %v182, 0.0
    %v191 = vmax.f32 %v183, 0.0
    %v192 = vmax.f32 %v184, 0.0
    %v193 = vmax.f32 %v185, 0.0
    %v194 = vld [vmem:[%s4] sm:$0xff]
    %v195 = vld [vmem:[%s4 + $0x8] sm:$0xff]
    %v196 = vld [vmem:[%s5] sm:$0x3]
    %198 = vset.pattern.permute.xlu0 0
    %199 = vperm.xlu0 %198, %v196
    %v200 = vpop.permute.xlu0 %199
    %v204 = vcombine.high %v194, %v194
    %v206 = vunpack.c.l.s4 1983009808
    %v207 = vunpack.c.0.s8 %v206
    %v208 = vlaneseq
    %v209 = vshrl.u32 %v208, 7
    %v210 = vsub.s32 %v207, %v209
    %v211 = vrot.slane %v194, %v210
    %v213 = vunpack.c.l.s4 1983009808
    %v214 = vunpack.c.0.s8 %v213
    %v215 = vlaneseq
    %v216 = vshrl.u32 %v215, 7
    %v217 = vsub.s32 %v214, %v216
    %v218 = vrot.slane %v204, %v217
    %v219 = vcombine.high %v211, %v211
    %v220 = vcombine.high %v218, %v218
    %v221 = vcombine.high %v195, %v195
    %v223 = vunpack.c.l.s4 1983009808
    %v224 = vunpack.c.0.s8 %v223
    %v225 = vlaneseq
    %v226 = vshrl.u32 %v225, 7
    %v227 = vsub.s32 %v224, %v226
    %v228 = vrot.slane %v195, %v227
    %v230 = vunpack.c.l.s4 1983009808
    %v231 = vunpack.c.0.s8 %v230
    %v232 = vlaneseq
    %v233 = vshrl.u32 %v232, 7
    %v234 = vsub.s32 %v231, %v233
    %v235 = vrot.slane %v221, %v234
    %v236 = vcombine.high %v228, %v228
    %v237 = vcombine.high %v235, %v235
    %246 = vmatprep.subr.mxu0 %v187
    %247 = vmatpush1.xpose.msra.mxu0 %v186
    %248 = vmatprep.subr.mxu0 0.0
    %249 = vmatpush1.xpose.msra.mxu0 0.0
    %250 = vmatprep.subr.mxu0 0.0
    %251 = vmatpush1.xpose.msra.mxu0 0.0
    %252 = vmatprep.subr.mxu0 0.0
    %253 = vmatpush1.xpose.msra.mxu0 0.0
    %254 = vmatprep.subr.mxu0 0.0
    %255 = vmatpush1.xpose.msra.mxu0 0.0
    %256 = vmatprep.subr.mxu0 0.0
    %257 = vmatpush1.xpose.msra.mxu0 0.0
    %258 = vmatprep.subr.mxu0 0.0
    %259 = vmatpush1.xpose.msra.mxu0 0.0
    %260 = vmatprep.subr.mxu0 0.0
    %261 = vmatpush1.xpose.msra.mxu0 0.0
    %262 = vmatprep.subr.mxu0 0.0
    %263 = vmatpush1.xpose.msra.mxu0 0.0
    %264 = vmatprep.subr.mxu0 0.0
    %265 = vmatpush1.xpose.msra.mxu0 0.0
    %266 = vmatprep.subr.mxu0 0.0
    %267 = vmatpush1.xpose.msra.mxu0 0.0
    %268 = vmatprep.subr.mxu0 0.0
    %269 = vmatpush1.xpose.msra.mxu0 0.0
    %270 = vmatprep.subr.mxu0 0.0
    %271 = vmatpush1.xpose.msra.mxu0 0.0
    %272 = vmatprep.subr.mxu0 0.0
    %273 = vmatpush1.xpose.msra.mxu0 0.0
    %274 = vmatprep.subr.mxu0 0.0
    %275 = vmatpush1.xpose.msra.mxu0 0.0
    %276 = vmatprep.subr.mxu0 0.0
    %277 = vmatpush1.xpose.msra.mxu0 0.0
    %278 = vmatprep.subr.mxu0 0.0
    %279 = vmatpush1.xpose.msra.mxu0 0.0
    %280 = vmatprep.subr.mxu0 0.0
    %281 = vmatpush1.xpose.msra.mxu0 0.0
    %282 = vmatprep.subr.mxu0 0.0
    %283 = vmatpush1.xpose.msra.mxu0 0.0
    %284 = vmatprep.subr.mxu0 0.0
    %285 = vmatpush1.xpose.msra.mxu0 0.0
    %286 = vmatprep.subr.mxu0 0.0
    %287 = vmatpush1.xpose.msra.mxu0 0.0
    %288 = vmatprep.subr.mxu0 0.0
    %289 = vmatpush1.xpose.msra.mxu0 0.0
    %290 = vmatprep.subr.mxu0 0.0
    %291 = vmatpush1.xpose.msra.mxu0 0.0
    %292 = vmatprep.subr.mxu0 0.0
    %293 = vmatpush1.xpose.msra.mxu0 0.0
    %294 = vmatprep.subr.mxu0 0.0
    %295 = vmatpush1.xpose.msra.mxu0 0.0
    %296 = vmatprep.subr.mxu0 0.0
    %297 = vmatpush1.xpose.msra.mxu0 0.0
    %298 = vmatprep.subr.mxu0 0.0
    %299 = vmatpush1.xpose.msra.mxu0 0.0
    %300 = vmatprep.subr.mxu0 0.0
    %301 = vmatpush1.xpose.msra.mxu0 0.0
    %302 = vmatprep.subr.mxu0 0.0
    %303 = vmatpush1.xpose.msra.mxu0 0.0
    %304 = vmatprep.subr.mxu0 0.0
    %305 = vmatpush1.xpose.msra.mxu0 0.0
    %306 = vmatprep.subr.mxu0 0.0
    %307 = vmatpush1.xpose.msra.mxu0 0.0
    %308 = vmatprep.subr.mxu0 0.0
    %309 = vmatpush1.xpose.msra.mxu0 0.0
    %310 = vmatprep.mubr.f32.mxu0 %v219
    %311 = vmatmul.mubr.f32.gmra.mrb[0].mxu0 %v211
    %v312 = vpop.f32.mrb[0].mxu0
    %v313 = vadd.f32 %v200, %v312
    %v314 = vpop.f32.mrb[0].mxu0
    %315 = vdwg.mxu0
    %316 = vmatprep.subr.mxu0 %v189
    %317 = vmatpush1.xpose.msra.mxu0 %v188
    %318 = vmatprep.subr.mxu0 0.0
    %319 = vmatpush1.xpose.msra.mxu0 0.0
    %320 = vmatprep.subr.mxu0 0.0
    %321 = vmatpush1.xpose.msra.mxu0 0.0
    %322 = vmatprep.subr.mxu0 0.0
    %323 = vmatpush1.xpose.msra.mxu0 0.0
    %324 = vmatprep.subr.mxu0 0.0
    %325 = vmatpush1.xpose.msra.mxu0 0.0
    %326 = vmatprep.subr.mxu0 0.0
    %327 = vmatpush1.xpose.msra.mxu0 0.0
    %328 = vmatprep.subr.mxu0 0.0
    %329 = vmatpush1.xpose.msra.mxu0 0.0
    %330 = vmatprep.subr.mxu0 0.0
    %331 = vmatpush1.xpose.msra.mxu0 0.0
    %332 = vmatprep.subr.mxu0 0.0
    %333 = vmatpush1.xpose.msra.mxu0 0.0
    %334 = vmatprep.subr.mxu0 0.0
    %335 = vmatpush1.xpose.msra.mxu0 0.0
    %336 = vmatprep.subr.mxu0 0.0
    %337 = vmatpush1.xpose.msra.mxu0 0.0
    %338 = vmatprep.subr.mxu0 0.0
    %339 = vmatpush1.xpose.msra.mxu0 0.0
    %340 = vmatprep.subr.mxu0 0.0
    %341 = vmatpush1.xpose.msra.mxu0 0.0
    %342 = vmatprep.subr.mxu0 0.0
    %343 = vmatpush1.xpose.msra.mxu0 0.0
    %344 = vmatprep.subr.mxu0 0.0
    %345 = vmatpush1.xpose.msra.mxu0 0.0
    %346 = vmatprep.subr.mxu0 0.0
    %347 = vmatpush1.xpose.msra.mxu0 0.0
    %348 = vmatprep.subr.mxu0 0.0
    %349 = vmatpush1.xpose.msra.mxu0 0.0
    %350 = vmatprep.subr.mxu0 0.0
    %351 = vmatpush1.xpose.msra.mxu0 0.0
    %352 = vmatprep.subr.mxu0 0.0
    %353 = vmatpush1.xpose.msra.mxu0 0.0
    %354 = vmatprep.subr.mxu0 0.0
    %355 = vmatpush1.xpose.msra.mxu0 0.0
    %356 = vmatprep.subr.mxu0 0.0
    %357 = vmatpush1.xpose.msra.mxu0 0.0
    %358 = vmatprep.subr.mxu0 0.0
    %359 = vmatpush1.xpose.msra.mxu0 0.0
    %360 = vmatprep.subr.mxu0 0.0
    %361 = vmatpush1.xpose.msra.mxu0 0.0
    %362 = vmatprep.subr.mxu0 0.0
    %363 = vmatpush1.xpose.msra.mxu0 0.0
    %364 = vmatprep.subr.mxu0 0.0
    %365 = vmatpush1.xpose.msra.mxu0 0.0
    %366 = vmatprep.subr.mxu0 0.0
    %367 = vmatpush1.xpose.msra.mxu0 0.0
    %368 = vmatprep.subr.mxu0 0.0
    %369 = vmatpush1.xpose.msra.mxu0 0.0
    %370 = vmatprep.subr.mxu0 0.0
    %371 = vmatpush1.xpose.msra.mxu0 0.0
    %372 = vmatprep.subr.mxu0 0.0
    %373 = vmatpush1.xpose.msra.mxu0 0.0
    %374 = vmatprep.subr.mxu0 0.0
    %375 = vmatpush1.xpose.msra.mxu0 0.0
    %376 = vmatprep.subr.mxu0 0.0
    %377 = vmatpush1.xpose.msra.mxu0 0.0
    %378 = vmatprep.subr.mxu0 0.0
    %379 = vmatpush1.xpose.msra.mxu0 0.0
    %380 = vmatprep.mubr.f32.mxu0 %v220
    %381 = vmatmul.mubr.f32.gmra.mrb[0].mxu0 %v218
    %v382 = vpop.f32.mrb[0].mxu0
    %v383 = vadd.f32 %v313, %v382
    %v384 = vpop.f32.mrb[0].mxu0
    %385 = vdwg.mxu0
    %386 = vmatprep.subr.mxu0 %v191
    %387 = vmatpush1.xpose.msra.mxu0 %v190
    %388 = vmatprep.subr.mxu0 0.0
    %389 = vmatpush1.xpose.msra.mxu0 0.0
    %390 = vmatprep.subr.mxu0 0.0
    %391 = vmatpush1.xpose.msra.mxu0 0.0
    %392 = vmatprep.subr.mxu0 0.0
    %393 = vmatpush1.xpose.msra.mxu0 0.0
    %394 = vmatprep.subr.mxu0 0.0
    %395 = vmatpush1.xpose.msra.mxu0 0.0
    %396 = vmatprep.subr.mxu0 0.0
    %397 = vmatpush1.xpose.msra.mxu0 0.0
    %398 = vmatprep.subr.mxu0 0.0
    %399 = vmatpush1.xpose.msra.mxu0 0.0
    %400 = vmatprep.subr.mxu0 0.0
    %401 = vmatpush1.xpose.msra.mxu0 0.0
    %402 = vmatprep.subr.mxu0 0.0
    %403 = vmatpush1.xpose.msra.mxu0 0.0
    %404 = vmatprep.subr.mxu0 0.0
    %405 = vmatpush1.xpose.msra.mxu0 0.0
    %406 = vmatprep.subr.mxu0 0.0
    %407 = vmatpush1.xpose.msra.mxu0 0.0
    %408 = vmatprep.subr.mxu0 0.0
    %409 = vmatpush1.xpose.msra.mxu0 0.0
    %410 = vmatprep.subr.mxu0 0.0
    %411 = vmatpush1.xpose.msra.mxu0 0.0
    %412 = vmatprep.subr.mxu0 0.0
    %413 = vmatpush1.xpose.msra.mxu0 0.0
    %414 = vmatprep.subr.mxu0 0.0
    %415 = vmatpush1.xpose.msra.mxu0 0.0
    %416 = vmatprep.subr.mxu0 0.0
    %417 = vmatpush1.xpose.msra.mxu0 0.0
    %418 = vmatprep.subr.mxu0 0.0
    %419 = vmatpush1.xpose.msra.mxu0 0.0
    %420 = vmatprep.subr.mxu0 0.0
    %421 = vmatpush1.xpose.msra.mxu0 0.0
    %422 = vmatprep.subr.mxu0 0.0
    %423 = vmatpush1.xpose.msra.mxu0 0.0
    %424 = vmatprep.subr.mxu0 0.0
    %425 = vmatpush1.xpose.msra.mxu0 0.0
    %426 = vmatprep.subr.mxu0 0.0
    %427 = vmatpush1.xpose.msra.mxu0 0.0
    %428 = vmatprep.subr.mxu0 0.0
    %429 = vmatpush1.xpose.msra.mxu0 0.0
    %430 = vmatprep.subr.mxu0 0.0
    %431 = vmatpush1.xpose.msra.mxu0 0.0
    %432 = vmatprep.subr.mxu0 0.0
    %433 = vmatpush1.xpose.msra.mxu0 0.0
    %434 = vmatprep.subr.mxu0 0.0
    %435 = vmatpush1.xpose.msra.mxu0 0.0
    %436 = vmatprep.subr.mxu0 0.0
    %437 = vmatpush1.xpose.msra.mxu0 0.0
    %438 = vmatprep.subr.mxu0 0.0
    %439 = vmatpush1.xpose.msra.mxu0 0.0
    %440 = vmatprep.subr.mxu0 0.0
    %441 = vmatpush1.xpose.msra.mxu0 0.0
    %442 = vmatprep.subr.mxu0 0.0
    %443 = vmatpush1.xpose.msra.mxu0 0.0
    %444 = vmatprep.subr.mxu0 0.0
    %445 = vmatpush1.xpose.msra.mxu0 0.0
    %446 = vmatprep.subr.mxu0 0.0
    %447 = vmatpush1.xpose.msra.mxu0 0.0
    %448 = vmatprep.subr.mxu0 0.0
    %449 = vmatpush1.xpose.msra.mxu0 0.0
    %450 = vmatprep.mubr.f32.mxu0 %v236
    %451 = vmatmul.mubr.f32.gmra.mrb[0].mxu0 %v228
    %v452 = vpop.f32.mrb[0].mxu0
    %v453 = vadd.f32 %v383, %v452
    %v454 = vpop.f32.mrb[0].mxu0
    %455 = vdwg.mxu0
    %456 = vmatprep.subr.mxu0 %v193
    %457 = vmatpush1.xpose.msra.mxu0 %v192
    %458 = vmatprep.subr.mxu0 0.0
    %459 = vmatpush1.xpose.msra.mxu0 0.0
    %460 = vmatprep.subr.mxu0 0.0
    %461 = vmatpush1.xpose.msra.mxu0 0.0
    %462 = vmatprep.subr.mxu0 0.0
    %463 = vmatpush1.xpose.msra.mxu0 0.0
    %464 = vmatprep.subr.mxu0 0.0
    %465 = vmatpush1.xpose.msra.mxu0 0.0
    %466 = vmatprep.subr.mxu0 0.0
    %467 = vmatpush1.xpose.msra.mxu0 0.0
    %468 = vmatprep.subr.mxu0 0.0
    %469 = vmatpush1.xpose.msra.mxu0 0.0
    %470 = vmatprep.subr.mxu0 0.0
    %471 = vmatpush1.xpose.msra.mxu0 0.0
    %472 = vmatprep.subr.mxu0 0.0
    %473 = vmatpush1.xpose.msra.mxu0 0.0
    %474 = vmatprep.subr.mxu0 0.0
    %475 = vmatpush1.xpose.msra.mxu0 0.0
    %476 = vmatprep.subr.mxu0 0.0
    %477 = vmatpush1.xpose.msra.mxu0 0.0
    %478 = vmatprep.subr.mxu0 0.0
    %479 = vmatpush1.xpose.msra.mxu0 0.0
    %480 = vmatprep.subr.mxu0 0.0
    %481 = vmatpush1.xpose.msra.mxu0 0.0
    %482 = vmatprep.subr.mxu0 0.0
    %483 = vmatpush1.xpose.msra.mxu0 0.0
    %484 = vmatprep.subr.mxu0 0.0
    %485 = vmatpush1.xpose.msra.mxu0 0.0
    %486 = vmatprep.subr.mxu0 0.0
    %487 = vmatpush1.xpose.msra.mxu0 0.0
    %488 = vmatprep.subr.mxu0 0.0
    %489 = vmatpush1.xpose.msra.mxu0 0.0
    %490 = vmatprep.subr.mxu0 0.0
    %491 = vmatpush1.xpose.msra.mxu0 0.0
    %492 = vmatprep.subr.mxu0 0.0
    %493 = vmatpush1.xpose.msra.mxu0 0.0
    %494 = vmatprep.subr.mxu0 0.0
    %495 = vmatpush1.xpose.msra.mxu0 0.0
    %496 = vmatprep.subr.mxu0 0.0
    %497 = vmatpush1.xpose.msra.mxu0 0.0
    %498 = vmatprep.subr.mxu0 0.0
    %499 = vmatpush1.xpose.msra.mxu0 0.0
    %500 = vmatprep.subr.mxu0 0.0
    %501 = vmatpush1.xpose.msra.mxu0 0.0
    %502 = vmatprep.subr.mxu0 0.0
    %503 = vmatpush1.xpose.msra.mxu0 0.0
    %504 = vmatprep.subr.mxu0 0.0
    %505 = vmatpush1.xpose.msra.mxu0 0.0
    %506 = vmatprep.subr.mxu0 0.0
    %507 = vmatpush1.xpose.msra.mxu0 0.0
    %508 = vmatprep.subr.mxu0 0.0
    %509 = vmatpush1.xpose.msra.mxu0 0.0
    %510 = vmatprep.subr.mxu0 0.0
    %511 = vmatpush1.xpose.msra.mxu0 0.0
    %512 = vmatprep.subr.mxu0 0.0
    %513 = vmatpush1.xpose.msra.mxu0 0.0
    %514 = vmatprep.subr.mxu0 0.0
    %515 = vmatpush1.xpose.msra.mxu0 0.0
    %516 = vmatprep.subr.mxu0 0.0
    %517 = vmatpush1.xpose.msra.mxu0 0.0
    %518 = vmatprep.subr.mxu0 0.0
    %519 = vmatpush1.xpose.msra.mxu0 0.0
    %520 = vmatprep.mubr.f32.mxu0 %v237
    %521 = vmatmul.mubr.f32.gmra.mrb[0].mxu0 %v235
    %v522 = vpop.f32.mrb[0].mxu0
    %v523 = vadd.f32 %v453, %v522
    %v524 = vpop.f32.mrb[0].mxu0
    %525 = vdwg.mxu0
    %vm526 = vcmask 58368
    %527 = vst.msk [vmem:[#allocation7] sm:$0x3] %vm526, %v523
    // Predicated region
    $region34: #{tpu_custom_call.1} parent=1 // pred_check
      _
    $region35: #{tpu_custom_call.1} parent=1 // pred_check_branch
      %529 = sbr.rel (0) target = $region37
    $region36: #{tpu_custom_call.1} parent=1 // pred_region
      %s531 = ssub.s32 32, 32
      %532 = vsyncadd [#allocation4], %s531
      %s534 = sshll.u32 [#allocation7], 4
      %s535 = int_to_ptr.vmem [resolvable:$true] %s534
      %537 = dma.vmem_to_hbm [thread:$0]  %s535, 32, %s6, [#allocation4]
    $region37: #{tpu_custom_call.1} parent=1 // pred_fallthru
      _
    // Predicated region
    $region38: #{tpu_custom_call.1} parent=1 // pred_check
      _
    $region39: #{tpu_custom_call.1} parent=1 // pred_check_branch
      %539 = sbr.rel (0) target = $region41
    $region40: #{tpu_custom_call.1} parent=1 // pred_region
      %540 = dma.done [#allocation4], 32
    $region41: #{tpu_custom_call.1} parent=1 // pred_fallthru
      _
    %541 = vsyncpa [#allocation3], 1
    %542 = vsyncpa [#allocation6], 1
    %543 = vsyncpa [#allocation4], 1

</llo_original>
